<compile_context>
chip_gen: v5e
topology: v5e:2x2
jax: 0.10.0
libtpu: 0.0.40
codegen_flags: <defaults>
</compile_context>

<pallas_src>
import jax
import jax.numpy as jnp
from jax.experimental import pallas as pl
from jax.experimental.pallas import tpu as pltpu


# --------------------------------------------------------------------------
# Kernel: fused twin-Q MLP on one batch tile (batch lives in lanes).
# --------------------------------------------------------------------------
def _fused_twinq_kernel(xu_ref, w1_ref, b1_ref, w2_ref, b2_ref, w3_ref, b3_ref,
                        q_ref):
    cdt = w1_ref.dtype  # compute dtype for MXU operands (f32 or bf16)

    # Layer 1 (fused heads): h^T = relu(W1f^T @ xu^T + b1^T)   -> [2H, tile_b]
    h = jnp.dot(w1_ref[...], xu_ref[...],
                preferred_element_type=jnp.float32) + b1_ref[...]
    h = jnp.maximum(h, 0.0)

    # Layer 2 (block-diagonal [2H, 2H] keeps the two heads independent)
    h = jnp.dot(w2_ref[...], h.astype(cdt),
                preferred_element_type=jnp.float32) + b2_ref[...]
    h = jnp.maximum(h, 0.0)

    # Layer 3 (block-diagonal [2, 2H]) -> lane-dense [2, tile_b] store
    q_ref[...] = (jnp.dot(w3_ref[...], h.astype(cdt),
                          preferred_element_type=jnp.float32) + b3_ref[...])


# --------------------------------------------------------------------------
# Param init (matches torch: Xavier-uniform gain=1 weights, zero biases).
# Raw weights stored as [in_features, out_features].
# --------------------------------------------------------------------------
def init_qnetwork_params(key, num_inputs, num_actions, hidden_dim):
    in_dim = num_inputs + num_actions

    def xavier(k, fan_in, fan_out):
        bound = (6.0 / (fan_in + fan_out)) ** 0.5
        return jax.random.uniform(k, (fan_in, fan_out), jnp.float32, -bound, bound)

    ks = jax.random.split(key, 6)
    return {
        "w1": xavier(ks[0], in_dim, hidden_dim), "b1": jnp.zeros((1, hidden_dim), jnp.float32),
        "w2": xavier(ks[1], hidden_dim, hidden_dim), "b2": jnp.zeros((1, hidden_dim), jnp.float32),
        "w3": xavier(ks[2], hidden_dim, 1), "b3": jnp.zeros((1, 1), jnp.float32),
        "w4": xavier(ks[3], in_dim, hidden_dim), "b4": jnp.zeros((1, hidden_dim), jnp.float32),
        "w5": xavier(ks[4], hidden_dim, hidden_dim), "b5": jnp.zeros((1, hidden_dim), jnp.float32),
        "w6": xavier(ks[5], hidden_dim, 1), "b6": jnp.zeros((1, 1), jnp.float32),
    }


def pack_qnetwork_params(params, dtype=jnp.float32):
    """Pack raw per-layer params into the fused, TRANSPOSED twin-head layout.
    Done ONCE (at init / after each optimizer step), not per forward call.

    dtype: compute dtype for the MXU operands (weights). Biases stay f32 so
    the bias add + ReLU run on the f32 accumulator (required on v5e, free on
    v6e/v7x)."""
    H = params["w1"].shape[1]
    zHH = jnp.zeros((H, H), jnp.float32)
    z1H = jnp.zeros((1, H), jnp.float32)

    # layer 1: fused heads, transposed -> [2H, in_dim]
    w1_t = jnp.concatenate([params["w1"].T, params["w4"].T], axis=0)
    b1_t = jnp.concatenate([params["b1"], params["b4"]], axis=1).T        # [2H, 1]
    # layer 2: block_diag(w2^T, w5^T) -> [2H, 2H]
    w2_t = jnp.concatenate(
        [jnp.concatenate([params["w2"].T, zHH], axis=1),
         jnp.concatenate([zHH, params["w5"].T], axis=1)], axis=0)
    b2_t = jnp.concatenate([params["b2"], params["b5"]], axis=1).T        # [2H, 1]
    # layer 3: block_diag(w3^T, w6^T) -> [2, 2H]
    w3_t = jnp.concatenate(
        [jnp.concatenate([params["w3"].T, z1H], axis=1),
         jnp.concatenate([z1H, params["w6"].T], axis=1)], axis=0)
    b3_t = jnp.concatenate([params["b3"], params["b6"]], axis=1).T        # [2, 1]

    return {
        "w1": w1_t.astype(dtype), "b1": b1_t,
        "w2": w2_t.astype(dtype), "b2": b2_t,
        "w3": w3_t.astype(dtype), "b3": b3_t,
    }


# --------------------------------------------------------------------------
# Tiling policy.
# --------------------------------------------------------------------------
_LANE = 128
_MAX_TILE_B = 2048   # lanes per grid step; ~1-2 MiB f32 intermediates per step


def _round_up(x, m):
    return ((x + m - 1) // m) * m


def _choose_batch_tiling(B):
    """Pick (tile_b, padded_B) minimizing pad waste; prefer an even number of
    parallel tiles when it adds no padding (uses both v7x TensorCores)."""
    pB = _round_up(max(B, 1), _LANE)
    n_tiles = pl.cdiv(pB, _MAX_TILE_B)
    if n_tiles == 1 and pB >= 2 * _LANE and (pB // _LANE) % 2 == 0:
        n_tiles = 2
    tile_b = _round_up(pl.cdiv(pB, n_tiles), _LANE)
    return tile_b, tile_b * n_tiles


# --------------------------------------------------------------------------
# Forward wrapper.
# --------------------------------------------------------------------------
def qnetwork_forward(state, action, packed):
    """Returns (q1, q2), each [B, 1] float32."""
    B, num_inputs = state.shape
    num_actions = action.shape[1]
    in_dim = num_inputs + num_actions
    H2 = packed["w1"].shape[0]                 # 2 * hidden_dim
    compute_dtype = packed["w1"].dtype

    tile_b, pB = _choose_batch_tiling(B)
    grid = (pB // tile_b,)

    # One fused, feature-major input stream [in_dim, pB].
    # (Transpose + concat + pad fuse into a single tiny XLA copy; only the last
    #  tile is ever padded because pB - B < tile_b.)
    xu_t = jnp.concatenate([state, action], axis=1).T.astype(compute_dtype)
    if pB != B:
        xu_t = jnp.pad(xu_t, ((0, 0), (0, pB - B)))

    itemsize = jnp.dtype(compute_dtype).itemsize
    flops = 2 * pB * (in_dim * H2 + H2 * H2 + H2 * 2)
    bytes_accessed = (itemsize * (pB * in_dim                        # input
                                  + in_dim * H2 + H2 * H2 + 2 * H2)  # weights
                      + 4 * (2 * H2 + 2                              # biases
                             + 2 * pB))                              # output
    cost = pl.CostEstimate(flops=flops, transcendentals=0,
                           bytes_accessed=bytes_accessed)

    batch_map = lambda i: (0, i)
    const_map = lambda i: (0, 0)     # weights/biases stay VMEM-resident

    out = pl.pallas_call(
        _fused_twinq_kernel,
        out_shape=jax.ShapeDtypeStruct((2, pB), jnp.float32),
        grid=grid,
        in_specs=[
            pl.BlockSpec((in_dim, tile_b), batch_map),
            pl.BlockSpec(packed["w1"].shape, const_map),
            pl.BlockSpec(packed["b1"].shape, const_map),
            pl.BlockSpec(packed["w2"].shape, const_map),
            pl.BlockSpec(packed["b2"].shape, const_map),
            pl.BlockSpec(packed["w3"].shape, const_map),
            pl.BlockSpec(packed["b3"].shape, const_map),
        ],
        out_specs=pl.BlockSpec((2, tile_b), batch_map),
        compiler_params=pltpu.CompilerParams(
            dimension_semantics=("parallel",)),
        cost_estimate=cost,
    )(xu_t,
      packed["w1"], packed["b1"],
      packed["w2"], packed["b2"],
      packed["w3"], packed["b3"])

    # Row 0 / row 1 are contiguous lane-dense slabs; padded cols are sliced off.
    return out[0, :B].reshape(B, 1), out[1, :B].reshape(B, 1)


# --------------------------------------------------------------------------
# Pure-JAX reference (unfused, matches the PyTorch module).
# --------------------------------------------------------------------------
def qnetwork_ref(state, action, params):
    xu = jnp.concatenate([state, action], axis=1)
    h1 = jax.nn.relu(xu @ params["w1"] + params["b1"])
    h1 = jax.nn.relu(h1 @ params["w2"] + params["b2"])
    q1 = h1 @ params["w3"] + params["b3"]
    h2 = jax.nn.relu(xu @ params["w4"] + params["b4"])
    h2 = jax.nn.relu(h2 @ params["w5"] + params["b5"])
    q2 = h2 @ params["w6"] + params["b6"]
    return q1, q2


if __name__ == "__main__":
    num_inputs, num_actions, hidden_dim = 12, 4, 32

    key = jax.random.PRNGKey(0)
    k_params, k_state, k_action = jax.random.split(key, 3)

    params = init_qnetwork_params(k_params, num_inputs, num_actions, hidden_dim)
    packed = pack_qnetwork_params(params)                  # packed once, f32

    # --- small inference-style batch ---
    B = 8
    state = jax.random.normal(k_state, (B, num_inputs), jnp.float32)
    action = jax.random.normal(k_action, (B, num_actions), jnp.float32)

    q1, q2 = qnetwork_forward(state, action, packed)
    q1 = jax.block_until_ready(q1)
    q2 = jax.block_until_ready(q2)

    q1_ref, q2_ref = qnetwork_ref(state, action, params)
    assert q1.shape == (B, 1) and q2.shape == (B, 1)
    assert jnp.allclose(q1, q1_ref, atol=1e-4, rtol=1e-4)
    assert jnp.allclose(q2, q2_ref, atol=1e-4, rtol=1e-4)

    # --- training-style batch: exercises the pad-to-640 (not 1024) path ---
    Bt = 600
    ks2, ka2 = jax.random.split(jax.random.PRNGKey(1))
    state_t = jax.random.normal(ks2, (Bt, num_inputs), jnp.float32)
    action_t = jax.random.normal(ka2, (Bt, num_actions), jnp.float32)

    q1t, q2t = qnetwork_forward(state_t, action_t, packed)
    q1t = jax.block_until_ready(q1t)
    q2t = jax.block_until_ready(q2t)

    q1t_ref, q2t_ref = qnetwork_ref(state_t, action_t, params)
    assert q1t.shape == (Bt, 1) and q2t.shape == (Bt, 1)
    assert jnp.allclose(q1t, q1t_ref, atol=1e-4, rtol=1e-4)
    assert jnp.allclose(q2t, q2t_ref, atol=1e-4, rtol=1e-4)

    # --- multi-tile batch (grid of 2 parallel tiles) ---
    Bm = 1024
    ks3, ka3 = jax.random.split(jax.random.PRNGKey(2))
    state_m = jax.random.normal(ks3, (Bm, num_inputs), jnp.float32)
    action_m = jax.random.normal(ka3, (Bm, num_actions), jnp.float32)
    q1m, q2m = qnetwork_forward(state_m, action_m, packed)
    q1m = jax.block_until_ready(q1m)
    q1m_ref, q2m_ref = qnetwork_ref(state_m, action_m, params)
    assert jnp.allclose(q1m, q1m_ref, atol=1e-4, rtol=1e-4)
    assert jnp.allclose(q2m, q2m_ref, atol=1e-4, rtol=1e-4)

    # --- optional bf16 operand path (v6e/v7x): f32 accumulation, loose parity ---
    packed_bf16 = pack_qnetwork_params(params, dtype=jnp.bfloat16)
    q1b, q2b = qnetwork_forward(state_t, action_t, packed_bf16)
    q1b = jax.block_until_ready(q1b)
    q2b = jax.block_until_ready(q2b)
    assert q1b.dtype == jnp.float32 and q2b.dtype == jnp.float32
    assert jnp.allclose(q1b, q1t_ref, atol=1e-1, rtol=1e-1)
    assert jnp.allclose(q2b, q2t_ref, atol=1e-1, rtol=1e-1)

    print("KERNEL_OK")
</pallas_src>

<mosaic_0001>
module attributes {stable_mosaic.version = 11 : i64} {
  func.func @_fused_twinq_kernel(%arg0: i32, %arg1: memref<16x128xf32, #tpu.memory_space<vmem>>, %arg2: memref<64x16xf32, #tpu.memory_space<vmem>>, %arg3: memref<64x1xf32, #tpu.memory_space<vmem>>, %arg4: memref<64x64xf32, #tpu.memory_space<vmem>>, %arg5: memref<64x1xf32, #tpu.memory_space<vmem>>, %arg6: memref<2x64xf32, #tpu.memory_space<vmem>>, %arg7: memref<2x1xf32, #tpu.memory_space<vmem>>, %arg8: memref<2x128xf32, #tpu.memory_space<vmem>>) attributes {dimension_semantics = [#tpu.dimension_semantics<parallel>], iteration_bounds = array<i64: 1>, scalar_prefetch = 0 : i64, scratch_operands = 0 : i64, tpu.core_type = #tpu.core_type<tc>, window_params = [{transform_indices = @transform_0, window_bounds = array<i64: 16, 128>}, {pipeline_mode = #tpu.pipeline_mode<synchronous>, transform_indices = @transform_1, window_bounds = array<i64: 64, 16>}, {pipeline_mode = #tpu.pipeline_mode<synchronous>, transform_indices = @transform_2, window_bounds = array<i64: 64, 1>}, {pipeline_mode = #tpu.pipeline_mode<synchronous>, transform_indices = @transform_3, window_bounds = array<i64: 64, 64>}, {pipeline_mode = #tpu.pipeline_mode<synchronous>, transform_indices = @transform_4, window_bounds = array<i64: 64, 1>}, {pipeline_mode = #tpu.pipeline_mode<synchronous>, transform_indices = @transform_5, window_bounds = array<i64: 2, 64>}, {pipeline_mode = #tpu.pipeline_mode<synchronous>, transform_indices = @transform_6, window_bounds = array<i64: 2, 1>}, {transform_indices = @transform_7, window_bounds = array<i64: 2, 128>}]} {
    %c0 = arith.constant 0 : index
    %c0_0 = arith.constant 0 : index
    %0 = vector.load %arg2[%c0, %c0_0] : memref<64x16xf32, #tpu.memory_space<vmem>>, vector<64x16xf32>
    %c0_1 = arith.constant 0 : index
    %c0_2 = arith.constant 0 : index
    %1 = vector.load %arg1[%c0_1, %c0_2] : memref<16x128xf32, #tpu.memory_space<vmem>>, vector<16x128xf32>
    %cst = arith.constant dense<0.000000e+00> : vector<64x128xf32>
    %2 = tpu.matmul %0, %1, %cst {dimension_numbers = #tpu.dot_dimension_numbers<[1], [0], [0], [1], [0, 0, 1, 1], [], []>} : vector<64x16xf32>, vector<16x128xf32>, vector<64x128xf32> -> vector<64x128xf32>
    %c0_3 = arith.constant 0 : index
    %c0_4 = arith.constant 0 : index
    %3 = vector.load %arg3[%c0_3, %c0_4] : memref<64x1xf32, #tpu.memory_space<vmem>>, vector<64x1xf32>
    %4 = vector.broadcast %3 : vector<64x1xf32> to vector<64x128xf32>
    %5 = arith.addf %2, %4 : vector<64x128xf32>
    %cst_5 = arith.constant 0.000000e+00 : f32
    %6 = vector.broadcast %cst_5 : f32 to vector<64x128xf32>
    %7 = arith.maximumf %5, %6 : vector<64x128xf32>
    %c0_6 = arith.constant 0 : index
    %c0_7 = arith.constant 0 : index
    %8 = vector.load %arg4[%c0_6, %c0_7] : memref<64x64xf32, #tpu.memory_space<vmem>>, vector<64x64xf32>
    %cst_8 = arith.constant dense<0.000000e+00> : vector<64x128xf32>
    %9 = tpu.matmul %8, %7, %cst_8 {dimension_numbers = #tpu.dot_dimension_numbers<[1], [0], [0], [1], [0, 0, 1, 1], [], []>} : vector<64x64xf32>, vector<64x128xf32>, vector<64x128xf32> -> vector<64x128xf32>
    %c0_9 = arith.constant 0 : index
    %c0_10 = arith.constant 0 : index
    %10 = vector.load %arg5[%c0_9, %c0_10] : memref<64x1xf32, #tpu.memory_space<vmem>>, vector<64x1xf32>
    %11 = vector.broadcast %10 : vector<64x1xf32> to vector<64x128xf32>
    %12 = arith.addf %9, %11 : vector<64x128xf32>
    %cst_11 = arith.constant 0.000000e+00 : f32
    %13 = vector.broadcast %cst_11 : f32 to vector<64x128xf32>
    %14 = arith.maximumf %12, %13 : vector<64x128xf32>
    %c0_12 = arith.constant 0 : index
    %c0_13 = arith.constant 0 : index
    %15 = vector.load %arg6[%c0_12, %c0_13] : memref<2x64xf32, #tpu.memory_space<vmem>>, vector<2x64xf32>
    %cst_14 = arith.constant dense<0.000000e+00> : vector<2x128xf32>
    %16 = tpu.matmul %15, %14, %cst_14 {dimension_numbers = #tpu.dot_dimension_numbers<[1], [0], [0], [1], [0, 0, 1, 1], [], []>} : vector<2x64xf32>, vector<64x128xf32>, vector<2x128xf32> -> vector<2x128xf32>
    %c0_15 = arith.constant 0 : index
    %c0_16 = arith.constant 0 : index
    %17 = vector.load %arg7[%c0_15, %c0_16] : memref<2x1xf32, #tpu.memory_space<vmem>>, vector<2x1xf32>
    %18 = vector.broadcast %17 : vector<2x1xf32> to vector<2x128xf32>
    %19 = arith.addf %16, %18 : vector<2x128xf32>
    %c0_17 = arith.constant 0 : index
    %c0_18 = arith.constant 0 : index
    %20 = vector.load %arg8[%c0_17, %c0_18] : memref<2x128xf32, #tpu.memory_space<vmem>>, vector<2x128xf32>
    tpu.vector_store %arg8[%c0_17, %c0_18], %19 {strides = array<i32>} : memref<2x128xf32, #tpu.memory_space<vmem>>, vector<2x128xf32>,
    return
  }
  func.func @transform_0(%arg0: i32) -> (i32, i32) {
    %c0_i32 = arith.constant 0 : i32
    %c0_i32_0 = arith.constant 0 : i32
    return %c0_i32, %arg0 : i32, i32
  }
  func.func @transform_1(%arg0: i32) -> (i32, i32) {
    %c0_i32 = arith.constant 0 : i32
    %c0_i32_0 = arith.constant 0 : i32
    %c0_i32_1 = arith.constant 0 : i32
    return %c0_i32, %c0_i32_0 : i32, i32
  }
  func.func @transform_2(%arg0: i32) -> (i32, i32) {
    %c0_i32 = arith.constant 0 : i32
    %c0_i32_0 = arith.constant 0 : i32
    %c0_i32_1 = arith.constant 0 : i32
    return %c0_i32, %c0_i32_0 : i32, i32
  }
  func.func @transform_3(%arg0: i32) -> (i32, i32) {
    %c0_i32 = arith.constant 0 : i32
    %c0_i32_0 = arith.constant 0 : i32
    %c0_i32_1 = arith.constant 0 : i32
    return %c0_i32, %c0_i32_0 : i32, i32
  }
  func.func @transform_4(%arg0: i32) -> (i32, i32) {
    %c0_i32 = arith.constant 0 : i32
    %c0_i32_0 = arith.constant 0 : i32
    %c0_i32_1 = arith.constant 0 : i32
    return %c0_i32, %c0_i32_0 : i32, i32
  }
  func.func @transform_5(%arg0: i32) -> (i32, i32) {
    %c0_i32 = arith.constant 0 : i32
    %c0_i32_0 = arith.constant 0 : i32
    %c0_i32_1 = arith.constant 0 : i32
    return %c0_i32, %c0_i32_0 : i32, i32
  }
  func.func @transform_6(%arg0: i32) -> (i32, i32) {
    %c0_i32 = arith.constant 0 : i32
    %c0_i32_0 = arith.constant 0 : i32
    %c0_i32_1 = arith.constant 0 : i32
    return %c0_i32, %c0_i32_0 : i32, i32
  }
  func.func @transform_7(%arg0: i32) -> (i32, i32) {
    %c0_i32 = arith.constant 0 : i32
    %c0_i32_0 = arith.constant 0 : i32
    return %c0_i32, %arg0 : i32, i32
  }
}

</mosaic_0001>

<llo_original>
// kernel: tpu_custom_call.1
$region0: #{tpu_custom_call.1}
  #allocation0 [shape = 'u32[]', space=smem, size = 0x4, offset = 0x4, fixed_abs, tag = 'smem constant byte address 0x4 - core index']
  #allocation1 [shape = 'u32[72,128]{1,0:T(1,128)}', space=vmem, size = 0x9000, scoped, tag = 'internal scratch']
  %s0 = inlined_call_operand.vmem [shape: f32[16,128], index: 0, kind: input, shape index: {}]
  %s1 = inlined_call_operand.vmem [shape: f32[64,16], index: 1, kind: input, shape index: {}]
  %s2 = inlined_call_operand.vmem [shape: f32[64,1], index: 2, kind: input, shape index: {}]
  %s3 = inlined_call_operand.vmem [shape: f32[64,64], index: 3, kind: input, shape index: {}]
  %s4 = inlined_call_operand.vmem [shape: f32[64,1], index: 4, kind: input, shape index: {}]
  %s5 = inlined_call_operand.vmem [shape: f32[2,64], index: 5, kind: input, shape index: {}]
  %s6 = inlined_call_operand.vmem [shape: f32[2,1], index: 6, kind: input, shape index: {}]
  %s7 = inlined_call_operand.hbm [shape: f32[2,128], index: 7, kind: output, shape index: {}]
  %s8 = sld [smem:[#allocation0]]
  $region38: #{tpu_custom_call.1} parent=0
    _
  %s10 = ssub.s32 1, %s8
  %s11 = scalar_select 0, %s10, %s8
  $region1: #{tpu_custom_call.1} parent=0
    #allocation2 [shape = 'u8[1024]{0}', space=vmem, size = 0x400, scoped, tag = 'output window, operand 0, single buffered']
    #allocation3 [shape = 's32[1]{0}', space=sflag, size = 0x4, scoped, tag = 'scoped memory for tpu_custom_call.1']
    %12 = vsyncpa [#allocation3], 0
    // Predicated region
    $region2: #{tpu_custom_call.1} parent=1 // pred_check
      _
    $region3: #{tpu_custom_call.1} parent=1 // pred_check_branch
      %14 = sbr.rel (0) target = $region5
    $region4: #{tpu_custom_call.1} parent=1 // pred_region
      _
    $region5: #{tpu_custom_call.1} parent=1 // pred_fallthru
      _
    // Predicated region
    $region6: #{tpu_custom_call.1} parent=1 // pred_check
      _
    $region7: #{tpu_custom_call.1} parent=1 // pred_check_branch
      %16 = sbr.rel (0) target = $region9
    $region8: #{tpu_custom_call.1} parent=1 // pred_region
      _
    $region9: #{tpu_custom_call.1} parent=1 // pred_fallthru
      _
    // Predicated region
    $region10: #{tpu_custom_call.1} parent=1 // pred_check
      _
    $region11: #{tpu_custom_call.1} parent=1 // pred_check_branch
      %18 = sbr.rel (0) target = $region13
    $region12: #{tpu_custom_call.1} parent=1 // pred_region
      _
    $region13: #{tpu_custom_call.1} parent=1 // pred_fallthru
      _
    // Predicated region
    $region14: #{tpu_custom_call.1} parent=1 // pred_check
      _
    $region15: #{tpu_custom_call.1} parent=1 // pred_check_branch
      %20 = sbr.rel (0) target = $region17
    $region16: #{tpu_custom_call.1} parent=1 // pred_region
      _
    $region17: #{tpu_custom_call.1} parent=1 // pred_fallthru
      _
    // Predicated region
    $region18: #{tpu_custom_call.1} parent=1 // pred_check
      _
    $region19: #{tpu_custom_call.1} parent=1 // pred_check_branch
      %22 = sbr.rel (0) target = $region21
    $region20: #{tpu_custom_call.1} parent=1 // pred_region
      _
    $region21: #{tpu_custom_call.1} parent=1 // pred_fallthru
      _
    // Predicated region
    $region22: #{tpu_custom_call.1} parent=1 // pred_check
      _
    $region23: #{tpu_custom_call.1} parent=1 // pred_check_branch
      %24 = sbr.rel (0) target = $region25
    $region24: #{tpu_custom_call.1} parent=1 // pred_region
      _
    $region25: #{tpu_custom_call.1} parent=1 // pred_fallthru
      _
    // Predicated region
    $region26: #{tpu_custom_call.1} parent=1 // pred_check
      _
    $region27: #{tpu_custom_call.1} parent=1 // pred_check_branch
      %26 = sbr.rel (0) target = $region29
    $region28: #{tpu_custom_call.1} parent=1 // pred_region
      _
    $region29: #{tpu_custom_call.1} parent=1 // pred_fallthru
      _
    %v27 = vld [vmem:[%s1] sm:$0xff]
    %v28 = vld [vmem:[%s1 + $0x8] sm:$0xff]
    %v29 = vld [vmem:[%s1 + $0x10] sm:$0xff]
    %v30 = vld [vmem:[%s1 + $0x18] sm:$0xff]
    %v31 = vld [vmem:[%s1 + $0x20] sm:$0xff]
    %v32 = vld [vmem:[%s1 + $0x28] sm:$0xff]
    %v33 = vld [vmem:[%s1 + $0x30] sm:$0xff]
    %v34 = vld [vmem:[%s1 + $0x38] sm:$0xff]
    %v35 = vld [vmem:[%s0] sm:$0xff]
    %v36 = vld [vmem:[%s0 + $0x8] sm:$0xff]
    %v37 = vld [vmem:[%s2] sm:$0xff]
    %v38 = vld [vmem:[%s2 + $0x8] sm:$0xff]
    %v39 = vld [vmem:[%s2 + $0x10] sm:$0xff]
    %v40 = vld [vmem:[%s2 + $0x18] sm:$0xff]
    %v41 = vld [vmem:[%s2 + $0x20] sm:$0xff]
    %v42 = vld [vmem:[%s2 + $0x28] sm:$0xff]
    %v43 = vld [vmem:[%s2 + $0x30] sm:$0xff]
    %v44 = vld [vmem:[%s2 + $0x38] sm:$0xff]
    %46 = vset.pattern.permute.xlu0 0
    %47 = vperm.xlu0 %46, %v37
    %v48 = vpop.permute.xlu0 %47
    %51 = vset.pattern.permute.xlu0 0
    %52 = vperm.xlu0 %51, %v38
    %v53 = vpop.permute.xlu0 %52
    %56 = vset.pattern.permute.xlu0 0
    %57 = vperm.xlu0 %56, %v39
    %v58 = vpop.permute.xlu0 %57
    %61 = vset.pattern.permute.xlu0 0
    %62 = vperm.xlu0 %61, %v40
    %v63 = vpop.permute.xlu0 %62
    %66 = vset.pattern.permute.xlu0 0
    %67 = vperm.xlu0 %66, %v41
    %v68 = vpop.permute.xlu0 %67
    %71 = vset.pattern.permute.xlu0 0
    %72 = vperm.xlu0 %71, %v42
    %v73 = vpop.permute.xlu0 %72
    %76 = vset.pattern.permute.xlu0 0
    %77 = vperm.xlu0 %76, %v43
    %v78 = vpop.permute.xlu0 %77
    %81 = vset.pattern.permute.xlu0 0
    %82 = vperm.xlu0 %81, %v44
    %v83 = vpop.permute.xlu0 %82
    %vm85 = vcmask 130048
    %v87 = vsel %vm85, %v27, 0
    %v90 = vsel %vm85, %v28, 0
    %v93 = vsel %vm85, %v29, 0
    %v96 = vsel %vm85, %v30, 0
    %v99 = vsel %vm85, %v31, 0
    %v102 = vsel %vm85, %v32, 0
    %v105 = vsel %vm85, %v33, 0
    %v108 = vsel %vm85, %v34, 0
    %110 = vmatpush.msra.mxu0 0.0
    %111 = vmatpush.msra.mxu0 0.0
    %112 = vmatpush.msra.mxu0 0.0
    %113 = vmatpush.msra.mxu0 0.0
    %114 = vmatpush.msra.mxu0 0.0
    %115 = vmatpush.msra.mxu0 0.0
    %116 = vmatpush.msra.mxu0 0.0
    %117 = vmatpush.msra.mxu0 0.0
    %118 = vmatpush.msra.mxu0 0.0
    %119 = vmatpush.msra.mxu0 0.0
    %120 = vmatpush.msra.mxu0 0.0
    %121 = vmatpush.msra.mxu0 0.0
    %122 = vmatpush.msra.mxu0 0.0
    %123 = vmatpush.msra.mxu0 0.0
    %124 = vmatpush.msra.mxu0 %v36
    %125 = vmatpush.msra.mxu0 %v35
    %126 = vmatmul.f32.gmra.mxu0 %v87
    %v127 = vpop.f32.mrf.mxu0
    %v128 = vadd.f32 %v48, %v127
    %129 = vmatmul.f32.gmra.mxu0 %v90
    %v130 = vpop.f32.mrf.mxu0
    %v131 = vadd.f32 %v53, %v130
    %132 = vmatmul.f32.gmra.mxu0 %v93
    %v133 = vpop.f32.mrf.mxu0
    %v134 = vadd.f32 %v58, %v133
    %135 = vmatmul.f32.gmra.mxu0 %v96
    %v136 = vpop.f32.mrf.mxu0
    %v137 = vadd.f32 %v63, %v136
    %138 = vmatmul.f32.gmra.mxu0 %v99
    %v139 = vpop.f32.mrf.mxu0
    %v140 = vadd.f32 %v68, %v139
    %141 = vmatmul.f32.gmra.mxu0 %v102
    %v142 = vpop.f32.mrf.mxu0
    %v143 = vadd.f32 %v73, %v142
    %144 = vmatmul.f32.gmra.mxu0 %v105
    %v145 = vpop.f32.mrf.mxu0
    %v146 = vadd.f32 %v78, %v145
    %147 = vmatmul.f32.gmra.mxu0 %v108
    %v148 = vpop.f32.mrf.mxu0
    %v149 = vadd.f32 %v83, %v148
    %150 = vdwg.mxu0
    %v151 = vmax.f32 %v128, 0.0
    %v152 = vmax.f32 %v131, 0.0
    %v153 = vmax.f32 %v134, 0.0
    %v154 = vmax.f32 %v137, 0.0
    %v155 = vmax.f32 %v140, 0.0
    %v156 = vmax.f32 %v143, 0.0
    %v157 = vmax.f32 %v146, 0.0
    %v158 = vmax.f32 %v149, 0.0
    %v159 = vld [vmem:[%s3] sm:$0xff]
    %v160 = vld [vmem:[%s3 + $0x8] sm:$0xff]
    %v161 = vld [vmem:[%s3 + $0x10] sm:$0xff]
    %v162 = vld [vmem:[%s3 + $0x18] sm:$0xff]
    %v163 = vld [vmem:[%s3 + $0x20] sm:$0xff]
    %v164 = vld [vmem:[%s3 + $0x28] sm:$0xff]
    %v165 = vld [vmem:[%s3 + $0x30] sm:$0xff]
    %v166 = vld [vmem:[%s3 + $0x38] sm:$0xff]
    %v167 = vld [vmem:[%s4] sm:$0xff]
    %v168 = vld [vmem:[%s4 + $0x8] sm:$0xff]
    %v169 = vld [vmem:[%s4 + $0x10] sm:$0xff]
    %v170 = vld [vmem:[%s4 + $0x18] sm:$0xff]
    %v171 = vld [vmem:[%s4 + $0x20] sm:$0xff]
    %v172 = vld [vmem:[%s4 + $0x28] sm:$0xff]
    %v173 = vld [vmem:[%s4 + $0x30] sm:$0xff]
    %v174 = vld [vmem:[%s4 + $0x38] sm:$0xff]
    %176 = vset.pattern.permute.xlu0 0
    %177 = vperm.xlu0 %176, %v167
    %v178 = vpop.permute.xlu0 %177
    %181 = vset.pattern.permute.xlu0 0
    %182 = vperm.xlu0 %181, %v168
    %v183 = vpop.permute.xlu0 %182
    %186 = vset.pattern.permute.xlu0 0
    %187 = vperm.xlu0 %186, %v169
    %v188 = vpop.permute.xlu0 %187
    %191 = vset.pattern.permute.xlu0 0
    %192 = vperm.xlu0 %191, %v170
    %v193 = vpop.permute.xlu0 %192
    %196 = vset.pattern.permute.xlu0 0
    %197 = vperm.xlu0 %196, %v171
    %v198 = vpop.permute.xlu0 %197
    %201 = vset.pattern.permute.xlu0 0
    %202 = vperm.xlu0 %201, %v172
    %v203 = vpop.permute.xlu0 %202
    %206 = vset.pattern.permute.xlu0 0
    %207 = vperm.xlu0 %206, %v173
    %v208 = vpop.permute.xlu0 %207
    %211 = vset.pattern.permute.xlu0 0
    %212 = vperm.xlu0 %211, %v174
    %v213 = vpop.permute.xlu0 %212
    %vm215 = vcmask 523264
    %v217 = vsel %vm215, %v159, 0
    %v220 = vsel %vm215, %v160, 0
    %v223 = vsel %vm215, %v161, 0
    %v226 = vsel %vm215, %v162, 0
    %v229 = vsel %vm215, %v163, 0
    %v232 = vsel %vm215, %v164, 0
    %v235 = vsel %vm215, %v165, 0
    %v238 = vsel %vm215, %v166, 0
    %240 = vmatpush.msra.mxu0 0.0
    %241 = vmatpush.msra.mxu0 0.0
    %242 = vmatpush.msra.mxu0 0.0
    %243 = vmatpush.msra.mxu0 0.0
    %244 = vmatpush.msra.mxu0 0.0
    %245 = vmatpush.msra.mxu0 0.0
    %246 = vmatpush.msra.mxu0 0.0
    %247 = vmatpush.msra.mxu0 0.0
    %248 = vmatpush.msra.mxu0 %v158
    %249 = vmatpush.msra.mxu0 %v157
    %250 = vmatpush.msra.mxu0 %v156
    %251 = vmatpush.msra.mxu0 %v155
    %252 = vmatpush.msra.mxu0 %v154
    %253 = vmatpush.msra.mxu0 %v153
    %254 = vmatpush.msra.mxu0 %v152
    %255 = vmatpush.msra.mxu0 %v151
    %256 = vmatmul.f32.gmra.mxu0 %v217
    %v257 = vpop.f32.mrf.mxu0
    %v258 = vadd.f32 %v178, %v257
    %259 = vmatmul.f32.gmra.mxu0 %v220
    %v260 = vpop.f32.mrf.mxu0
    %v261 = vadd.f32 %v183, %v260
    %262 = vmatmul.f32.gmra.mxu0 %v223
    %v263 = vpop.f32.mrf.mxu0
    %v264 = vadd.f32 %v188, %v263
    %265 = vmatmul.f32.gmra.mxu0 %v226
    %v266 = vpop.f32.mrf.mxu0
    %v267 = vadd.f32 %v193, %v266
    %268 = vmatmul.f32.gmra.mxu0 %v229
    %v269 = vpop.f32.mrf.mxu0
    %v270 = vadd.f32 %v198, %v269
    %271 = vmatmul.f32.gmra.mxu0 %v232
    %v272 = vpop.f32.mrf.mxu0
    %v273 = vadd.f32 %v203, %v272
    %274 = vmatmul.f32.gmra.mxu0 %v235
    %v275 = vpop.f32.mrf.mxu0
    %v276 = vadd.f32 %v208, %v275
    %277 = vmatmul.f32.gmra.mxu0 %v238
    %v278 = vpop.f32.mrf.mxu0
    %v279 = vadd.f32 %v213, %v278
    %280 = vdwg.mxu0
    %v281 = vmax.f32 %v258, 0.0
    %v282 = vmax.f32 %v261, 0.0
    %v283 = vmax.f32 %v264, 0.0
    %v284 = vmax.f32 %v267, 0.0
    %v285 = vmax.f32 %v270, 0.0
    %v286 = vmax.f32 %v273, 0.0
    %v287 = vmax.f32 %v276, 0.0
    %v288 = vmax.f32 %v279, 0.0
    %v289 = vld [vmem:[%s5] sm:$0x3]
    %v290 = vld [vmem:[%s6] sm:$0x3]
    %292 = vset.pattern.permute.xlu0 0
    %293 = vperm.xlu0 %292, %v290
    %v294 = vpop.permute.xlu0 %293
    %v297 = vsel %vm215, %v289, 0
    %299 = vmatpush.msra.mxu0 0.0
    %300 = vmatpush.msra.mxu0 0.0
    %301 = vmatpush.msra.mxu0 0.0
    %302 = vmatpush.msra.mxu0 0.0
    %303 = vmatpush.msra.mxu0 0.0
    %304 = vmatpush.msra.mxu0 0.0
    %305 = vmatpush.msra.mxu0 0.0
    %306 = vmatpush.msra.mxu0 0.0
    %307 = vmatpush.msra.mxu0 %v288
    %308 = vmatpush.msra.mxu0 %v287
    %309 = vmatpush.msra.mxu0 %v286
    %310 = vmatpush.msra.mxu0 %v285
    %311 = vmatpush.msra.mxu0 %v284
    %312 = vmatpush.msra.mxu0 %v283
    %313 = vmatpush.msra.mxu0 %v282
    %314 = vmatpush.msra.mxu0 %v281
    %315 = vmatmul.f32.gmra.mxu0 %v297
    %v316 = vpop.f32.mrf.mxu0
    %v317 = vadd.f32 %v294, %v316
    %318 = vdwg.mxu0
    %319 = vst [vmem:[#allocation2] sm:$0x3] %v317
    // Predicated region
    $region30: #{tpu_custom_call.1} parent=1 // pred_check
      _
    $region31: #{tpu_custom_call.1} parent=1 // pred_check_branch
      %321 = sbr.rel (0) target = $region33
    $region32: #{tpu_custom_call.1} parent=1 // pred_region
      %323 = vsyncadd [#allocation3], 0
      %s325 = sshll.u32 [#allocation2], 4
      %s326 = int_to_ptr.vmem [resolvable:$true] %s325
      %s327 = sshll.u32 %s7, 4
      %s328 = int_to_ptr.hbm [resolvable:$true] %s327
      %330 = dma.vmem_to_hbm [thread:$0]  %s326, 32, %s328, [#allocation3]
    $region33: #{tpu_custom_call.1} parent=1 // pred_fallthru
      _
    // Predicated region
    $region34: #{tpu_custom_call.1} parent=1 // pred_check
      _
    $region35: #{tpu_custom_call.1} parent=1 // pred_check_branch
      %332 = sbr.rel (0) target = $region37
    $region36: #{tpu_custom_call.1} parent=1 // pred_region
      %334 = dma.done [#allocation3], 32
    $region37: #{tpu_custom_call.1} parent=1 // pred_fallthru
      _
    %335 = vsyncpa [#allocation3], 1

</llo_original>
